<compile_context>
chip_gen: v6e
topology: v6e:2x2x1
jax: 0.10.0
libtpu: 0.0.40
codegen_flags: <defaults>
</compile_context>

<pallas_src>
import functools

import jax
import jax.numpy as jnp
from jax.experimental import pallas as pl
from jax.experimental.pallas import tpu as pltpu

BN_EPS = 1e-5
LANE = 128
SUBLANE = 8


def _rup(n, m):
    return (n + m - 1) // m * m


def _pad2(a, rows, cols):
    pr, pc = rows - a.shape[0], cols - a.shape[1]
    if pr == 0 and pc == 0:
        return a
    return jnp.pad(a, ((0, pr), (0, pc)))


def mlp_kernel(x_ref,
               w0_ref, b0_ref, g0_ref, bt0_ref,
               w1_ref, b1_ref,
               w2_ref, b2_ref,
               o_ref,
               sum_ref, sumsq_ref, scale_ref, shift_ref,
               *maybe_h0_cache,
               nbt, b_real, b_pad, eps, cache_h0):
    """Two-pass MLP forward with exact full-batch BatchNorm statistics.

    grid = (2, nbt), both axes "arbitrary" (pass 1 depends on pass-0 scratch):
      pass 0 (stats): h0 = relu(x @ W0 + b0) per batch tile; accumulate the
        per-feature sum (plus sum-of-squares when not caching h0).  h0 tiles are
        stashed in a persistent VMEM cache when enabled.  Zero-padded batch rows
        contribute exactly relu(b0) each, so they are removed in closed form at
        the finalize step (no per-element mask).  The last step folds BN into a
        per-feature scale/shift; with the cache, variance is computed centered.
      pass 1 (compute): hn = h0*scale + shift, Linear1 + ReLU, Linear2, store.
    """
    p = pl.program_id(0)   # 0 = stats pass, 1 = compute pass
    i = pl.program_id(1)   # batch tile
    h0_cache = maybe_h0_cache[0] if cache_h0 else None

    def linear0():
        x = x_ref[...].astype(w0_ref.dtype)        # no-op when x is already bf16
        h = jnp.dot(x, w0_ref[...], preferred_element_type=jnp.float32)
        return jnp.maximum(h + b0_ref[...], 0.0)

    @pl.when(p == 0)
    def _stats_pass():
        @pl.when(i == 0)
        def _init():
            sum_ref[...] = jnp.zeros_like(sum_ref)
            sumsq_ref[...] = jnp.zeros_like(sumsq_ref)

        h0 = linear0()
        sum_ref[...] += jnp.sum(h0, axis=0, keepdims=True)
        if cache_h0:
            h0_cache[i] = h0                        # f32: pass 1 reuses exactly these values
        else:
            sumsq_ref[...] += jnp.sum(h0 * h0, axis=0, keepdims=True)

        @pl.when(i == nbt - 1)
        def _finalize():
            npad = float(b_pad - b_real)
            inv_b = 1.0 / float(b_real)
            pad_h = jnp.maximum(b0_ref[...], 0.0)   # h0 of a zero-padded batch row
            mean = (sum_ref[...] - npad * pad_h) * inv_b
            if cache_h0:
                # Centered variance over the VMEM-resident h0 cache: exact, no
                # E[h^2]-mean^2 cancellation, zero extra HBM traffic.
                def body(t, acc):
                    d = h0_cache[t] - mean
                    return acc + jnp.sum(d * d, axis=0, keepdims=True)
                css = jax.lax.fori_loop(0, nbt, body, jnp.zeros_like(mean))
                css = css - npad * (pad_h - mean) * (pad_h - mean)
            else:
                css = (sumsq_ref[...] - npad * pad_h * pad_h
                       - float(b_real) * mean * mean)
            var = jnp.maximum(css * inv_b, 0.0)
            scale = jax.lax.rsqrt(var + eps) * g0_ref[...]
            scale_ref[...] = scale
            shift_ref[...] = bt0_ref[...] - mean * scale

    @pl.when(p == 1)
    def _compute_pass():
        h0 = h0_cache[i] if cache_h0 else linear0()
        hn = h0 * scale_ref[...] + shift_ref[...]   # folded BN: one FMA per element

        h1 = jnp.dot(hn.astype(w1_ref.dtype), w1_ref[...],
                     preferred_element_type=jnp.float32)
        h1 = jnp.maximum(h1 + b1_ref[...], 0.0)

        out = jnp.dot(h1.astype(w2_ref.dtype), w2_ref[...],
                      preferred_element_type=jnp.float32) + b2_ref[...]
        o_ref[...] = out.astype(o_ref.dtype)


def multi_layer_forward(x, params, tb=None):
    """x: [B, input_shape] f32. params: dict of f32 weights (see init_params)."""
    B, IN = x.shape
    H0 = params["w0_t"].shape[1]
    H1 = params["w1_t"].shape[1]
    OUT = params["w2_t"].shape[1]

    # Lane-dense padding of every feature dim (zero-padded weights/biases keep
    # the padded columns identically zero through every layer).
    INp, H0p, H1p, OUTp = (_rup(d, LANE) for d in (IN, H0, H1, OUT))

    # Big batch tiles: per-grid-step overhead (~0.35 us) dominates this light kernel.
    if tb is None:
        tb = min(_rup(B, SUBLANE), 1024)
    tb = max(SUBLANE, _rup(tb, SUBLANE))
    Bp = _rup(B, tb)
    nbt = Bp // tb

    # Cache the whole h0 activation in VMEM across grid steps when it fits: pass 1
    # then avoids the second x HBM read and the first-matmul recompute.
    cache_h0 = Bp * H0p * 4 <= (16 << 20)

    # Skip the wrapper-side pad/convert pass for x when no padding is needed (the
    # kernel casts to bf16 on the fly); otherwise pad + convert once.
    if Bp == B and INp == IN:
        xp = x
    else:
        xp = _pad2(x, Bp, INp).astype(jnp.bfloat16)

    w0 = _pad2(params["w0_t"], INp, H0p).astype(jnp.bfloat16)
    b0 = _pad2(params["b0"], 1, H0p)
    g0 = _pad2(params["gamma0"], 1, H0p)
    t0 = _pad2(params["beta0"], 1, H0p)
    w1 = _pad2(params["w1_t"], H0p, H1p).astype(jnp.bfloat16)
    b1 = _pad2(params["b1"], 1, H1p)
    w2 = _pad2(params["w2_t"], H1p, OUTp).astype(jnp.bfloat16)
    b2 = _pad2(params["b2"], 1, OUTp)

    # Weights/biases: full-array blocks, resident in VMEM for the whole grid.
    full = lambda a: pl.BlockSpec(a.shape, lambda p, i: (0, 0))

    if cache_h0:
        # Pass 1 parks x on block 0 (one redundant tile fetch, then no x DMAs).
        x_spec = pl.BlockSpec((tb, INp), lambda p, i: (i * (1 - p), 0))
    else:
        x_spec = pl.BlockSpec((tb, INp), lambda p, i: (i, 0))

    # Output gets one extra dummy row-block (index nbt): all pass-0 steps park
    # there, so every real output block is written exactly once, by its pass-1
    # step.  Robust against output revisit/writeback semantics; the dummy rows
    # are sliced off below.
    out_rows = Bp + tb
    out_spec = pl.BlockSpec((tb, OUTp), lambda p, i: (p * i + (1 - p) * nbt, 0))

    scratch = [pltpu.VMEM((1, H0p), jnp.float32),   # per-feature sum
               pltpu.VMEM((1, H0p), jnp.float32),   # per-feature sum of squares
               pltpu.VMEM((1, H0p), jnp.float32),   # folded BN scale
               pltpu.VMEM((1, H0p), jnp.float32)]   # folded BN shift
    if cache_h0:
        scratch.append(pltpu.VMEM((nbt, tb, H0p), jnp.float32))

    # Explicit VMEM budget sized from the actual buffers (v5e scoped default is
    # only 16 MiB); clamp below v7x's 64 MiB physical VMEM.
    est = (2 * tb * INp * 4 + 2 * tb * OUTp * 4                  # x / out tiles (double-buffered)
           + 2 * 2 * (INp * H0p + H0p * H1p + H1p * OUTp)        # bf16 weights (double-buffered)
           + 2 * 4 * 8 * (4 * H0p + H1p + OUTp)                  # bias rows (sublane-padded)
           + 4 * 4 * H0p                                         # stats scratch
           + (Bp * H0p * 4 if cache_h0 else 0)                   # h0 cache
           + 2 * tb * (H0p + H1p + OUTp) * 4)                    # f32 temporaries
    vmem_limit = int(min(max(2 * est + (4 << 20), 32 << 20), 56 << 20))

    kernel = functools.partial(mlp_kernel, nbt=nbt, b_real=B, b_pad=Bp,
                               eps=BN_EPS, cache_h0=cache_h0)

    out = pl.pallas_call(
        kernel,
        out_shape=jax.ShapeDtypeStruct((out_rows, OUTp), jnp.float32),
        grid=(2, nbt),
        in_specs=[x_spec,
                  full(w0), full(b0), full(g0), full(t0),
                  full(w1), full(b1), full(w2), full(b2)],
        out_specs=out_spec,
        scratch_shapes=scratch,
        compiler_params=pltpu.CompilerParams(
            # Pass 1 depends on pass-0 scratch and stats accumulate across batch
            # tiles -> both axes stay "arbitrary".
            # TODO(synk): on v7x (2 TensorCores) split into a stats pallas_call +
            # a compute pallas_call with the batch axis marked "parallel".
            dimension_semantics=("arbitrary", "arbitrary"),
            vmem_limit_bytes=vmem_limit),
    )(xp, w0, b0, g0, t0, w1, b1, w2, b2)

    return out[:B, :OUT]


def _kaiming_uniform(key, fan_in, shape, gain):
    # torch.nn.init.kaiming_uniform_: bound = gain * sqrt(3 / fan_in)
    bound = gain * jnp.sqrt(3.0 / fan_in)
    return jax.random.uniform(key, shape, jnp.float32, -bound, bound)


def init_params(key, input_shape, out_shape, layers):
    """Deterministic init mirroring MultiLayerModel.init_weights().

    init_weights() uses kaiming_uniform_ with nonlinearity='relu' (gain sqrt(2))
    for the hidden Linears and default a=0 leaky_relu (also gain sqrt(2)) for the
    last Linear, plus normal_ biases; BN stays at gamma=1, beta=0.
    """
    assert len(layers) == 2, "this script instantiates layers=[h0, h1]"
    k = jax.random.split(key, 6)
    gain = jnp.sqrt(2.0)
    w0 = _kaiming_uniform(k[0], input_shape, (layers[0], input_shape), gain)
    b0 = jax.random.normal(k[1], (layers[0],), jnp.float32)
    w1 = _kaiming_uniform(k[2], layers[0], (layers[1], layers[0]), gain)
    b1 = jax.random.normal(k[3], (layers[1],), jnp.float32)
    w2 = _kaiming_uniform(k[4], layers[1], (out_shape, layers[1]), gain)
    b2 = jax.random.normal(k[5], (out_shape,), jnp.float32)
    return {
        "w0_t": w0.T, "b0": b0.reshape(1, -1),
        "gamma0": jnp.ones((1, layers[0]), jnp.float32),
        "beta0": jnp.zeros((1, layers[0]), jnp.float32),
        "w1_t": w1.T, "b1": b1.reshape(1, -1),
        "w2_t": w2.T, "b2": b2.reshape(1, -1),
    }


def reference_forward(x, p):
    """Pure-JAX reference mirroring the kernel's numerics (bf16 MXU inputs,
    f32 accumulation, training-mode BN with biased, centered batch variance)."""
    bf = lambda a: a.astype(jnp.bfloat16)
    h = jnp.dot(bf(x), bf(p["w0_t"]), preferred_element_type=jnp.float32) + p["b0"]
    h = jnp.maximum(h, 0.0)
    mean = jnp.mean(h, axis=0, keepdims=True)
    var = jnp.mean((h - mean) ** 2, axis=0, keepdims=True)
    h = (h - mean) * jax.lax.rsqrt(var + BN_EPS) * p["gamma0"] + p["beta0"]
    h = jnp.dot(bf(h), bf(p["w1_t"]), preferred_element_type=jnp.float32) + p["b1"]
    h = jnp.maximum(h, 0.0)
    return jnp.dot(bf(h), bf(p["w2_t"]), preferred_element_type=jnp.float32) + p["b2"]


if __name__ == "__main__":
    # MultiLayerModel(input_shape=32, out_shape=16, layers=[64, 48]).
    B, IN, OUT = 120, 32, 16
    LAYERS = [64, 48]

    key = jax.random.PRNGKey(0)
    kx, kp = jax.random.split(key)
    x = jax.random.normal(kx, (B, IN), jnp.float32)
    params = init_params(kp, IN, OUT, LAYERS)

    y_ref = reference_forward(x, params)

    # Multi-tile config: tb=64 -> 2 batch tiles, 120 -> 128 row padding exercises
    # the closed-form pad correction, the VMEM h0 cache and the dummy out block.
    y = jax.block_until_ready(multi_layer_forward(x, params, tb=64))
    assert y.shape == (B, OUT)
    assert jnp.allclose(y, y_ref, atol=2e-2, rtol=2e-2), "mismatch vs reference (tb=64)"

    # Default (large) tile: single batch tile path.
    y2 = jax.block_until_ready(multi_layer_forward(x, params))
    assert jnp.allclose(y2, y_ref, atol=2e-2, rtol=2e-2), "mismatch vs reference (default tb)"

    print("KERNEL_OK")
</pallas_src>

<mosaic_0001>
module attributes {stable_mosaic.version = 11 : i64} {
  func.func @mlp_kernel(%arg0: i32, %arg1: i32, %arg2: memref<64x128xbf16, #tpu.memory_space<vmem>>, %arg3: memref<128x128xbf16, #tpu.memory_space<vmem>>, %arg4: memref<1x128xf32, #tpu.memory_space<vmem>>, %arg5: memref<1x128xf32, #tpu.memory_space<vmem>>, %arg6: memref<1x128xf32, #tpu.memory_space<vmem>>, %arg7: memref<128x128xbf16, #tpu.memory_space<vmem>>, %arg8: memref<1x128xf32, #tpu.memory_space<vmem>>, %arg9: memref<128x128xbf16, #tpu.memory_space<vmem>>, %arg10: memref<1x128xf32, #tpu.memory_space<vmem>>, %arg11: memref<64x128xf32, #tpu.memory_space<vmem>>, %arg12: memref<1x128xf32, #tpu.memory_space<vmem>>, %arg13: memref<1x128xf32, #tpu.memory_space<vmem>>, %arg14: memref<1x128xf32, #tpu.memory_space<vmem>>, %arg15: memref<1x128xf32, #tpu.memory_space<vmem>>, %arg16: memref<2x64x128xf32, #tpu.memory_space<vmem>>) attributes {dimension_semantics = [#tpu.dimension_semantics<arbitrary>, #tpu.dimension_semantics<arbitrary>], iteration_bounds = array<i64: 2, 2>, scalar_prefetch = 0 : i64, scratch_operands = 5 : i64, tpu.core_type = #tpu.core_type<tc>, window_params = [{transform_indices = @transform_0, window_bounds = array<i64: 64, 128>}, {pipeline_mode = #tpu.pipeline_mode<synchronous>, transform_indices = @transform_1, window_bounds = array<i64: 128, 128>}, {pipeline_mode = #tpu.pipeline_mode<synchronous>, transform_indices = @transform_2, window_bounds = array<i64: 1, 128>}, {pipeline_mode = #tpu.pipeline_mode<synchronous>, transform_indices = @transform_3, window_bounds = array<i64: 1, 128>}, {pipeline_mode = #tpu.pipeline_mode<synchronous>, transform_indices = @transform_4, window_bounds = array<i64: 1, 128>}, {pipeline_mode = #tpu.pipeline_mode<synchronous>, transform_indices = @transform_5, window_bounds = array<i64: 128, 128>}, {pipeline_mode = #tpu.pipeline_mode<synchronous>, transform_indices = @transform_6, window_bounds = array<i64: 1, 128>}, {pipeline_mode = #tpu.pipeline_mode<synchronous>, transform_indices = @transform_7, window_bounds = array<i64: 128, 128>}, {pipeline_mode = #tpu.pipeline_mode<synchronous>, transform_indices = @transform_8, window_bounds = array<i64: 1, 128>}, {transform_indices = @transform_9, window_bounds = array<i64: 64, 128>}]} {
    %c0_i32 = arith.constant 0 : i32
    %0 = arith.cmpi eq, %arg0, %c0_i32 : i32
    %1 = arith.extui %0 : i1 to i32
    %c0_i32_0 = arith.constant 0 : i32
    %2 = arith.cmpi ne, %1, %c0_i32_0 : i32
    scf.if %2 {
      %c0_i32_2 = arith.constant 0 : i32
      %6 = arith.cmpi eq, %arg1, %c0_i32_2 : i32
      %7 = arith.extui %6 : i1 to i32
      %c0_i32_3 = arith.constant 0 : i32
      %8 = arith.cmpi ne, %7, %c0_i32_3 : i32
      scf.if %8 {
        %cst_19 = arith.constant 0.000000e+00 : f32
        %29 = vector.broadcast %cst_19 : f32 to vector<1x128xf32>
        %c0_20 = arith.constant 0 : index
        %c0_21 = arith.constant 0 : index
        %30 = vector.load %arg12[%c0_20, %c0_21] : memref<1x128xf32, #tpu.memory_space<vmem>>, vector<1x128xf32>
        tpu.vector_store %arg12[%c0_20, %c0_21], %29 {strides = array<i32>} : memref<1x128xf32, #tpu.memory_space<vmem>>, vector<1x128xf32>,
        %cst_22 = arith.constant 0.000000e+00 : f32
        %31 = vector.broadcast %cst_22 : f32 to vector<1x128xf32>
        %c0_23 = arith.constant 0 : index
        %c0_24 = arith.constant 0 : index
        %32 = vector.load %arg13[%c0_23, %c0_24] : memref<1x128xf32, #tpu.memory_space<vmem>>, vector<1x128xf32>
        tpu.vector_store %arg13[%c0_23, %c0_24], %31 {strides = array<i32>} : memref<1x128xf32, #tpu.memory_space<vmem>>, vector<1x128xf32>,
      } else {
      }
      %c0 = arith.constant 0 : index
      %c0_4 = arith.constant 0 : index
      %9 = vector.load %arg2[%c0, %c0_4] : memref<64x128xbf16, #tpu.memory_space<vmem>>, vector<64x128xbf16>
      %c0_5 = arith.constant 0 : index
      %c0_6 = arith.constant 0 : index
      %10 = vector.load %arg3[%c0_5, %c0_6] : memref<128x128xbf16, #tpu.memory_space<vmem>>, vector<128x128xbf16>
      %cst = arith.constant dense<0.000000e+00> : vector<64x128xf32>
      %11 = tpu.matmul %9, %10, %cst {dimension_numbers = #tpu.dot_dimension_numbers<[1], [0], [0], [1], [0, 0, 1, 1], [], []>} : vector<64x128xbf16>, vector<128x128xbf16>, vector<64x128xf32> -> vector<64x128xf32>
      %c0_7 = arith.constant 0 : index
      %c0_8 = arith.constant 0 : index
      %12 = vector.load %arg4[%c0_7, %c0_8] : memref<1x128xf32, #tpu.memory_space<vmem>>, vector<1x128xf32>
      %13 = vector.broadcast %12 : vector<1x128xf32> to vector<64x128xf32>
      %14 = arith.addf %11, %13 : vector<64x128xf32>
      %cst_9 = arith.constant 0.000000e+00 : f32
      %15 = vector.broadcast %cst_9 : f32 to vector<64x128xf32>
      %16 = arith.maximumf %14, %15 : vector<64x128xf32>
      %c0_10 = arith.constant 0 : index
      %c0_11 = arith.constant 0 : index
      %17 = vector.load %arg12[%c0_10, %c0_11] : memref<1x128xf32, #tpu.memory_space<vmem>>, vector<1x128xf32>
      %cst_12 = arith.constant dense<0.000000e+00> : vector<128xf32>
      %18 = vector.multi_reduction <add>, %16, %cst_12 [0] : vector<64x128xf32> to vector<128xf32>
      %19 = vector.shape_cast %18 : vector<128xf32> to vector<1x128xf32>
      %20 = arith.addf %17, %19 : vector<1x128xf32>
      %c0_13 = arith.constant 0 : index
      %c0_14 = arith.constant 0 : index
      %21 = vector.load %arg12[%c0_13, %c0_14] : memref<1x128xf32, #tpu.memory_space<vmem>>, vector<1x128xf32>
      tpu.vector_store %arg12[%c0_13, %c0_14], %20 {strides = array<i32>} : memref<1x128xf32, #tpu.memory_space<vmem>>, vector<1x128xf32>,
      %22 = arith.index_cast %arg1 : i32 to index
      %c0_15 = arith.constant 0 : index
      %c0_16 = arith.constant 0 : index
      %23 = vector.load %arg16[%22, %c0_15, %c0_16] : memref<2x64x128xf32, #tpu.memory_space<vmem>>, vector<1x64x128xf32>
      %24 = vector.shape_cast %23 : vector<1x64x128xf32> to vector<64x128xf32>
      %25 = vector.shape_cast %16 : vector<64x128xf32> to vector<1x64x128xf32>
      tpu.vector_store %arg16[%22, %c0_15, %c0_16], %25 {strides = array<i32>} : memref<2x64x128xf32, #tpu.memory_space<vmem>>, vector<1x64x128xf32>,
      %c1_i32_17 = arith.constant 1 : i32
      %26 = arith.cmpi eq, %arg1, %c1_i32_17 : i32
      %27 = arith.extui %26 : i1 to i32
      %c0_i32_18 = arith.constant 0 : i32
      %28 = arith.cmpi ne, %27, %c0_i32_18 : i32
      scf.if %28 {
        %c0_19 = arith.constant 0 : index
        %c0_20 = arith.constant 0 : index
        %29 = vector.load %arg4[%c0_19, %c0_20] : memref<1x128xf32, #tpu.memory_space<vmem>>, vector<1x128xf32>
        %cst_21 = arith.constant 0.000000e+00 : f32
        %30 = vector.broadcast %cst_21 : f32 to vector<1x128xf32>
        %31 = arith.maximumf %29, %30 : vector<1x128xf32>
        %c0_22 = arith.constant 0 : index
        %c0_23 = arith.constant 0 : index
        %32 = vector.load %arg12[%c0_22, %c0_23] : memref<1x128xf32, #tpu.memory_space<vmem>>, vector<1x128xf32>
        %cst_24 = arith.constant 8.000000e+00 : f32
        %33 = vector.broadcast %cst_24 : f32 to vector<1x128xf32>
        %34 = arith.mulf %33, %31 : vector<1x128xf32>
        %35 = arith.subf %32, %34 : vector<1x128xf32>
        %cst_25 = arith.constant 0.00833333377 : f32
        %36 = vector.broadcast %cst_25 : f32 to vector<1x128xf32>
        %37 = arith.mulf %35, %36 : vector<1x128xf32>
        %cst_26 = arith.constant 0.000000e+00 : f32
        %38 = vector.broadcast %cst_26 : f32 to vector<1x128xf32>
        %c0_i32_27 = arith.constant 0 : i32
        %c2_i32 = arith.constant 2 : i32
        %39 = arith.addi %c0_i32_27, %c2_i32 : i32
        %c1_i32_28 = arith.constant 1 : i32
        %40 = scf.for %arg17 = %c0_i32_27 to %39 step %c1_i32_28 iter_args(%arg18 = %38) -> (vector<1x128xf32>)  : i32 {
          %61 = arith.index_cast %arg17 : i32 to index
          %c0_42 = arith.constant 0 : index
          %c0_43 = arith.constant 0 : index
          %62 = vector.load %arg16[%61, %c0_42, %c0_43] : memref<2x64x128xf32, #tpu.memory_space<vmem>>, vector<1x64x128xf32>
          %63 = vector.shape_cast %62 : vector<1x64x128xf32> to vector<64x128xf32>
          %64 = vector.broadcast %37 : vector<1x128xf32> to vector<64x128xf32>
          %65 = arith.subf %63, %64 : vector<64x128xf32>
          %66 = arith.mulf %65, %65 : vector<64x128xf32>
          %cst_44 = arith.constant dense<0.000000e+00> : vector<128xf32>
          %67 = vector.multi_reduction <add>, %66, %cst_44 [0] : vector<64x128xf32> to vector<128xf32>
          %68 = vector.shape_cast %67 : vector<128xf32> to vector<1x128xf32>
          %69 = arith.addf %arg18, %68 : vector<1x128xf32>
          scf.yield %69 : vector<1x128xf32>
        }
        %c2_i32_29 = arith.constant 2 : i32
        %41 = arith.subf %31, %37 : vector<1x128xf32>
        %cst_30 = arith.constant 8.000000e+00 : f32
        %42 = vector.broadcast %cst_30 : f32 to vector<1x128xf32>
        %43 = arith.mulf %42, %41 : vector<1x128xf32>
        %44 = arith.subf %31, %37 : vector<1x128xf32>
        %45 = arith.mulf %43, %44 : vector<1x128xf32>
        %46 = arith.subf %40, %45 : vector<1x128xf32>
        %cst_31 = arith.constant 0.00833333377 : f32
        %47 = vector.broadcast %cst_31 : f32 to vector<1x128xf32>
        %48 = arith.mulf %46, %47 : vector<1x128xf32>
        %cst_32 = arith.constant 0.000000e+00 : f32
        %49 = vector.broadcast %cst_32 : f32 to vector<1x128xf32>
        %50 = arith.maximumf %48, %49 : vector<1x128xf32>
        %cst_33 = arith.constant 9.99999974E-6 : f32
        %51 = vector.broadcast %cst_33 : f32 to vector<1x128xf32>
        %52 = arith.addf %50, %51 : vector<1x128xf32>
        %53 = math.rsqrt %52 : vector<1x128xf32>
        %c0_34 = arith.constant 0 : index
        %c0_35 = arith.constant 0 : index
        %54 = vector.load %arg5[%c0_34, %c0_35] : memref<1x128xf32, #tpu.memory_space<vmem>>, vector<1x128xf32>
        %55 = arith.mulf %53, %54 : vector<1x128xf32>
        %c0_36 = arith.constant 0 : index
        %c0_37 = arith.constant 0 : index
        %56 = vector.load %arg14[%c0_36, %c0_37] : memref<1x128xf32, #tpu.memory_space<vmem>>, vector<1x128xf32>
        tpu.vector_store %arg14[%c0_36, %c0_37], %55 {strides = array<i32>} : memref<1x128xf32, #tpu.memory_space<vmem>>, vector<1x128xf32>,
        %c0_38 = arith.constant 0 : index
        %c0_39 = arith.constant 0 : index
        %57 = vector.load %arg6[%c0_38, %c0_39] : memref<1x128xf32, #tpu.memory_space<vmem>>, vector<1x128xf32>
        %58 = arith.mulf %37, %55 : vector<1x128xf32>
        %59 = arith.subf %57, %58 : vector<1x128xf32>
        %c0_40 = arith.constant 0 : index
        %c0_41 = arith.constant 0 : index
        %60 = vector.load %arg15[%c0_40, %c0_41] : memref<1x128xf32, #tpu.memory_space<vmem>>, vector<1x128xf32>
        tpu.vector_store %arg15[%c0_40, %c0_41], %59 {strides = array<i32>} : memref<1x128xf32, #tpu.memory_space<vmem>>, vector<1x128xf32>,
      } else {
      }
    } else {
    }
    %c1_i32 = arith.constant 1 : i32
    %3 = arith.cmpi eq, %arg0, %c1_i32 : i32
    %4 = arith.extui %3 : i1 to i32
    %c0_i32_1 = arith.constant 0 : i32
    %5 = arith.cmpi ne, %4, %c0_i32_1 : i32
    scf.if %5 {
      %6 = arith.index_cast %arg1 : i32 to index
      %c0 = arith.constant 0 : index
      %c0_2 = arith.constant 0 : index
      %7 = vector.load %arg16[%6, %c0, %c0_2] : memref<2x64x128xf32, #tpu.memory_space<vmem>>, vector<1x64x128xf32>
      %8 = vector.shape_cast %7 : vector<1x64x128xf32> to vector<64x128xf32>
      %c0_3 = arith.constant 0 : index
      %c0_4 = arith.constant 0 : index
      %9 = vector.load %arg14[%c0_3, %c0_4] : memref<1x128xf32, #tpu.memory_space<vmem>>, vector<1x128xf32>
      %10 = vector.broadcast %9 : vector<1x128xf32> to vector<64x128xf32>
      %11 = arith.mulf %8, %10 : vector<64x128xf32>
      %c0_5 = arith.constant 0 : index
      %c0_6 = arith.constant 0 : index
      %12 = vector.load %arg15[%c0_5, %c0_6] : memref<1x128xf32, #tpu.memory_space<vmem>>, vector<1x128xf32>
      %13 = vector.broadcast %12 : vector<1x128xf32> to vector<64x128xf32>
      %14 = arith.addf %11, %13 : vector<64x128xf32>
      %15 = arith.truncf %14 : vector<64x128xf32> to vector<64x128xbf16>
      %c0_7 = arith.constant 0 : index
      %c0_8 = arith.constant 0 : index
      %16 = vector.load %arg7[%c0_7, %c0_8] : memref<128x128xbf16, #tpu.memory_space<vmem>>, vector<128x128xbf16>
      %cst = arith.constant dense<0.000000e+00> : vector<64x128xf32>
      %17 = tpu.matmul %15, %16, %cst {dimension_numbers = #tpu.dot_dimension_numbers<[1], [0], [0], [1], [0, 0, 1, 1], [], []>} : vector<64x128xbf16>, vector<128x128xbf16>, vector<64x128xf32> -> vector<64x128xf32>
      %c0_9 = arith.constant 0 : index
      %c0_10 = arith.constant 0 : index
      %18 = vector.load %arg8[%c0_9, %c0_10] : memref<1x128xf32, #tpu.memory_space<vmem>>, vector<1x128xf32>
      %19 = vector.broadcast %18 : vector<1x128xf32> to vector<64x128xf32>
      %20 = arith.addf %17, %19 : vector<64x128xf32>
      %cst_11 = arith.constant 0.000000e+00 : f32
      %21 = vector.broadcast %cst_11 : f32 to vector<64x128xf32>
      %22 = arith.maximumf %20, %21 : vector<64x128xf32>
      %23 = arith.truncf %22 : vector<64x128xf32> to vector<64x128xbf16>
      %c0_12 = arith.constant 0 : index
      %c0_13 = arith.constant 0 : index
      %24 = vector.load %arg9[%c0_12, %c0_13] : memref<128x128xbf16, #tpu.memory_space<vmem>>, vector<128x128xbf16>
      %cst_14 = arith.constant dense<0.000000e+00> : vector<64x128xf32>
      %25 = tpu.matmul %23, %24, %cst_14 {dimension_numbers = #tpu.dot_dimension_numbers<[1], [0], [0], [1], [0, 0, 1, 1], [], []>} : vector<64x128xbf16>, vector<128x128xbf16>, vector<64x128xf32> -> vector<64x128xf32>
      %c0_15 = arith.constant 0 : index
      %c0_16 = arith.constant 0 : index
      %26 = vector.load %arg10[%c0_15, %c0_16] : memref<1x128xf32, #tpu.memory_space<vmem>>, vector<1x128xf32>
      %27 = vector.broadcast %26 : vector<1x128xf32> to vector<64x128xf32>
      %28 = arith.addf %25, %27 : vector<64x128xf32>
      %c0_17 = arith.constant 0 : index
      %c0_18 = arith.constant 0 : index
      %29 = vector.load %arg11[%c0_17, %c0_18] : memref<64x128xf32, #tpu.memory_space<vmem>>, vector<64x128xf32>
      tpu.vector_store %arg11[%c0_17, %c0_18], %28 {strides = array<i32>} : memref<64x128xf32, #tpu.memory_space<vmem>>, vector<64x128xf32>,
    } else {
    }
    return
  }
  func.func @transform_0(%arg0: i32, %arg1: i32) -> (i32, i32) {
    %c1_i32 = arith.constant 1 : i32
    %0 = arith.subi %c1_i32, %arg0 : i32
    %1 = arith.muli %arg1, %0 : i32
    %c0_i32 = arith.constant 0 : i32
    %c0_i32_0 = arith.constant 0 : i32
    return %1, %c0_i32 : i32, i32
  }
  func.func @transform_1(%arg0: i32, %arg1: i32) -> (i32, i32) {
    %c0_i32 = arith.constant 0 : i32
    %c0_i32_0 = arith.constant 0 : i32
    %c0_i32_1 = arith.constant 0 : i32
    return %c0_i32, %c0_i32_0 : i32, i32
  }
  func.func @transform_2(%arg0: i32, %arg1: i32) -> (i32, i32) {
    %c0_i32 = arith.constant 0 : i32
    %c0_i32_0 = arith.constant 0 : i32
    %c0_i32_1 = arith.constant 0 : i32
    return %c0_i32, %c0_i32_0 : i32, i32
  }
  func.func @transform_3(%arg0: i32, %arg1: i32) -> (i32, i32) {
    %c0_i32 = arith.constant 0 : i32
    %c0_i32_0 = arith.constant 0 : i32
    %c0_i32_1 = arith.constant 0 : i32
    return %c0_i32, %c0_i32_0 : i32, i32
  }
  func.func @transform_4(%arg0: i32, %arg1: i32) -> (i32, i32) {
    %c0_i32 = arith.constant 0 : i32
    %c0_i32_0 = arith.constant 0 : i32
    %c0_i32_1 = arith.constant 0 : i32
    return %c0_i32, %c0_i32_0 : i32, i32
  }
  func.func @transform_5(%arg0: i32, %arg1: i32) -> (i32, i32) {
    %c0_i32 = arith.constant 0 : i32
    %c0_i32_0 = arith.constant 0 : i32
    %c0_i32_1 = arith.constant 0 : i32
    return %c0_i32, %c0_i32_0 : i32, i32
  }
  func.func @transform_6(%arg0: i32, %arg1: i32) -> (i32, i32) {
    %c0_i32 = arith.constant 0 : i32
    %c0_i32_0 = arith.constant 0 : i32
    %c0_i32_1 = arith.constant 0 : i32
    return %c0_i32, %c0_i32_0 : i32, i32
  }
  func.func @transform_7(%arg0: i32, %arg1: i32) -> (i32, i32) {
    %c0_i32 = arith.constant 0 : i32
    %c0_i32_0 = arith.constant 0 : i32
    %c0_i32_1 = arith.constant 0 : i32
    return %c0_i32, %c0_i32_0 : i32, i32
  }
  func.func @transform_8(%arg0: i32, %arg1: i32) -> (i32, i32) {
    %c0_i32 = arith.constant 0 : i32
    %c0_i32_0 = arith.constant 0 : i32
    %c0_i32_1 = arith.constant 0 : i32
    return %c0_i32, %c0_i32_0 : i32, i32
  }
  func.func @transform_9(%arg0: i32, %arg1: i32) -> (i32, i32) {
    %0 = arith.muli %arg0, %arg1 : i32
    %c1_i32 = arith.constant 1 : i32
    %1 = arith.subi %c1_i32, %arg0 : i32
    %c2_i32 = arith.constant 2 : i32
    %2 = arith.muli %1, %c2_i32 : i32
    %3 = arith.addi %0, %2 : i32
    %c0_i32 = arith.constant 0 : i32
    %c0_i32_0 = arith.constant 0 : i32
    return %3, %c0_i32 : i32, i32
  }
}

</mosaic_0001>

<llo_original>
// kernel: tpu_custom_call.1
$region0: #{tpu_custom_call.1}
  #allocation0 [shape = 'u32[]', space=smem, size = 0x4, offset = 0x4, fixed_abs, tag = 'smem constant byte address 0x4 - core index']
  #allocation1 [shape = 'u32[144,128]{1,0:T(1,128)}', space=vmem, size = 0x12000, scoped, tag = 'internal scratch']
  #allocation2 [shape = 'f32[1,128]{1,0:T(1,128)}', space=vmem, size = 0x200, scoped, tag = 'scratch operand']
  #allocation3 [shape = 'f32[1,128]{1,0:T(1,128)}', space=vmem, size = 0x200, scoped, tag = 'scratch operand']
  #allocation4 [shape = 'f32[1,128]{1,0:T(1,128)}', space=vmem, size = 0x200, scoped, tag = 'scratch operand']
  #allocation5 [shape = 'f32[1,128]{1,0:T(1,128)}', space=vmem, size = 0x200, scoped, tag = 'scratch operand']
  #allocation6 [shape = 'f32[2,64,128]{2,1,0:T(8,128)}', space=vmem, size = 0x10000, scoped, tag = 'scratch operand']
  %s0 = inlined_call_operand.hbm [shape: bf16[128,128], index: 0, kind: input, shape index: {}]
  %s1 = inlined_call_operand.hbm [shape: bf16[128,128], index: 1, kind: input, shape index: {}]
  %s2 = inlined_call_operand.vmem [shape: f32[1,128], index: 2, kind: input, shape index: {}]
  %s3 = inlined_call_operand.vmem [shape: f32[1,128], index: 3, kind: input, shape index: {}]
  %s4 = inlined_call_operand.vmem [shape: f32[1,128], index: 4, kind: input, shape index: {}]
  %s5 = inlined_call_operand.hbm [shape: bf16[128,128], index: 5, kind: input, shape index: {}]
  %s6 = inlined_call_operand.vmem [shape: f32[1,128], index: 6, kind: input, shape index: {}]
  %s7 = inlined_call_operand.hbm [shape: bf16[128,128], index: 7, kind: input, shape index: {}]
  %s8 = inlined_call_operand.vmem [shape: f32[1,128], index: 8, kind: input, shape index: {}]
  %s9 = inlined_call_operand.hbm [shape: f32[192,128], index: 9, kind: output, shape index: {}]
  %s10 = sld [smem:[#allocation0]]
  $region108: #{tpu_custom_call.1} parent=0
    _
  %s12 = ssub.s32 1, %s10
  %s13 = scalar_select 0, %s12, %s10
  $region1: #{tpu_custom_call.1} parent=0
    #allocation7 [shape = 'u8[32768]{0}', space=vmem, size = 0x8000, scoped, tag = 'input window, operand 0']
    #allocation8 [shape = 's32[2]{0}', space=sflag, size = 0x8, scoped, tag = 'scoped memory for tpu_custom_call.1']
    #allocation9 [shape = 's32[2]{0}', space=sflag, size = 0x8, scoped, tag = 'scoped memory for tpu_custom_call.1']
    #allocation10 [shape = 'u8[32768]{0}', space=vmem, size = 0x8000, scoped, tag = 'input window, operand 1, single buffered']
    #allocation11 [shape = 's32[1]{0}', space=sflag, size = 0x4, scoped, tag = 'scoped memory for tpu_custom_call.1']
    #allocation12 [shape = 'u8[32768]{0}', space=vmem, size = 0x8000, scoped, tag = 'input window, operand 5, single buffered']
    #allocation13 [shape = 'u8[32768]{0}', space=vmem, size = 0x8000, scoped, tag = 'input window, operand 7, single buffered']
    #allocation14 [shape = 's32[1]{0}', space=sflag, size = 0x4, scoped, tag = 'scoped memory for tpu_custom_call.1']
    #allocation15 [shape = 'u8[65536]{0}', space=vmem, size = 0x10000, scoped, tag = 'output window, operand 0']
    %14 = vsyncpa [#allocation8], 0
    %s15 = scalar_lea.sflag [#allocation8], 1
    %16 = vsyncpa %s15, 0
    %17 = vsyncpa [#allocation11], 0
    %18 = vsyncpa [#allocation14], 0
    %19 = vsyncpa [#allocation9], 0
    %s20 = scalar_lea.sflag [#allocation9], 1
    %21 = vsyncpa %s20, 0
    loop: start=0, step=1, limit=6
    $region2: #{tpu_custom_call.1} parent=1 // loop_pre_header
      _
    $region3: #{tpu_custom_call.1} parent=1 // loop_header
      %s23 = sphi 0, %s27
      %p24 = scmp.ge.s32.totalorder %s23, 6
      %s30 = sphi 0, %s42
      %s31 = sphi 0, %s38
      %s32 = sphi 0, %s30
      %s33 = sphi 0, %s31
      %s34 = sphi 0, %s32
      %s35 = sphi 0, %s33
      %s49 = sphi 0, %s51
      %s52 = sphi 0, %s49
      %s53 = sphi 0, %s52
      %s69 = sphi 0, %s53
      %s73 = sphi 0, %s73
      %s75 = sphi 0, %s73
      %s76 = sphi 0, %s75
      %s90 = sphi 0, %s76
      %s94 = sphi 0, %s94
      %s96 = sphi 0, %s94
      %s97 = sphi 0, %s96
      %s111 = sphi 0, %s97
      %s115 = sphi 0, %s115
      %s117 = sphi 0, %s115
      %s118 = sphi 0, %s117
      %s132 = sphi 0, %s118
      %s136 = sphi 0, %s136
      %s138 = sphi 0, %s136
      %s139 = sphi 0, %s138
      %s153 = sphi 0, %s139
      %s157 = sphi 0, %s157
      %s159 = sphi 0, %s157
      %s160 = sphi 0, %s159
      %s174 = sphi 0, %s160
      %s178 = sphi 0, %s178
      %s180 = sphi 0, %s178
      %s181 = sphi 0, %s180
      %s195 = sphi 0, %s181
      %s199 = sphi 0, %s199
      %s201 = sphi 0, %s199
      %s202 = sphi 0, %s201
      %s216 = sphi 0, %s202
      %s220 = sphi 0, %s220
      %s222 = sphi 0, %s220
      %s223 = sphi 0, %s222
      %s237 = sphi 0, %s223
      %s251 = sphi 0, %s253
      %s254 = sphi 0, %s251
      %s255 = sphi 0, %s254
      %s271 = sphi 0, %s255
    $region4: #{tpu_custom_call.1} parent=1 // loop_header_branch
      %26 = sbr.rel (%p24) target = $region8
    $region5: #{tpu_custom_call.1} parent=1 // loop_body
      %s28 = ssub.s32 %s23, 1
      %s29 = ssub.s32 %s23, 2
      %s36 = sadd.s32 1, %s31
      %p37 = scmp.ge.s32.totalorder %s36, 2
      %s38 = scalar_select %p37, 0, %s36
      %s39 = sadd.s32 1, %s30
      %s40 = scalar_select %p37, %s39, %s30
      %p41 = scmp.ge.s32.totalorder %s40, 2
      %s42 = scalar_select %p41, 0, %s40
      %s43 = ssub.s32 1, %s30
      %s44 = smul.u32 %s31, %s43
      %s45 = ssub.s32 1, %s42
      %s46 = smul.u32 %s38, %s45
      %s47 = ssub.s32 %s44, %s46
      %p48 = scmp.eq.s32.totalorder %s47, 0
      %s50 = sadd.s32 %s49, 1
      %s51 = scalar_select %p48, %s49, %s50
      %p54 = pneg %p48
      %p55 = scmp.eq.s32.totalorder %s23, 3
      %p56 = por %p54, %p55
      %p57 = scmp.ne.s32.totalorder %s49, %s52
      %p58 = scmp.eq.s32.totalorder %s23, 0
      %p59 = por %p57, %p58
      %p60 = scmp.ne.s32.totalorder %s49, %s52
      %p61 = scmp.eq.s32.totalorder %s28, 3
      %p62 = por %p60, %p61
      %p63 = scmp.ne.s32.totalorder %s52, %s53
      %p64 = scmp.eq.s32.totalorder %s28, 0
      %p65 = por %p63, %p64
      %p66 = scmp.ne.s32.totalorder %s52, %s53
      %p67 = scmp.eq.s32.totalorder %s29, 3
      %p68 = por %p66, %p67
      %p70 = scmp.ne.s32.totalorder %s53, %s69
      %p71 = scmp.eq.s32.totalorder %s29, 0
      %p72 = por %p70, %p71
      %s74 = sadd.s32 %s73, 1
      %p77 = scmp.eq.s32.totalorder %s23, 3
      %p78 = scmp.ne.s32.totalorder %s73, %s75
      %p79 = scmp.eq.s32.totalorder %s23, 0
      %p80 = por %p78, %p79
      %p81 = scmp.ne.s32.totalorder %s73, %s75
      %p82 = scmp.eq.s32.totalorder %s28, 3
      %p83 = por %p81, %p82
      %p84 = scmp.ne.s32.totalorder %s75, %s76
      %p85 = scmp.eq.s32.totalorder %s28, 0
      %p86 = por %p84, %p85
      %p87 = scmp.ne.s32.totalorder %s75, %s76
      %p88 = scmp.eq.s32.totalorder %s29, 3
      %p89 = por %p87, %p88
      %p91 = scmp.ne.s32.totalorder %s76, %s90
      %p92 = scmp.eq.s32.totalorder %s29, 0
      %p93 = por %p91, %p92
      %s95 = sadd.s32 %s94, 1
      %p98 = scmp.eq.s32.totalorder %s23, 3
      %p99 = scmp.ne.s32.totalorder %s94, %s96
      %p100 = scmp.eq.s32.totalorder %s23, 0
      %p101 = por %p99, %p100
      %p102 = scmp.ne.s32.totalorder %s94, %s96
      %p103 = scmp.eq.s32.totalorder %s28, 3
      %p104 = por %p102, %p103
      %p105 = scmp.ne.s32.totalorder %s96, %s97
      %p106 = scmp.eq.s32.totalorder %s28, 0
      %p107 = por %p105, %p106
      %p108 = scmp.ne.s32.totalorder %s96, %s97
      %p109 = scmp.eq.s32.totalorder %s29, 3
      %p110 = por %p108, %p109
      %p112 = scmp.ne.s32.totalorder %s97, %s111
      %p113 = scmp.eq.s32.totalorder %s29, 0
      %p114 = por %p112, %p113
      %s116 = sadd.s32 %s115, 1
      %p119 = scmp.eq.s32.totalorder %s23, 3
      %p120 = scmp.ne.s32.totalorder %s115, %s117
      %p121 = scmp.eq.s32.totalorder %s23, 0
      %p122 = por %p120, %p121
      %p123 = scmp.ne.s32.totalorder %s115, %s117
      %p124 = scmp.eq.s32.totalorder %s28, 3
      %p125 = por %p123, %p124
      %p126 = scmp.ne.s32.totalorder %s117, %s118
      %p127 = scmp.eq.s32.totalorder %s28, 0
      %p128 = por %p126, %p127
      %p129 = scmp.ne.s32.totalorder %s117, %s118
      %p130 = scmp.eq.s32.totalorder %s29, 3
      %p131 = por %p129, %p130
      %p133 = scmp.ne.s32.totalorder %s118, %s132
      %p134 = scmp.eq.s32.totalorder %s29, 0
      %p135 = por %p133, %p134
      %s137 = sadd.s32 %s136, 1
      %p140 = scmp.eq.s32.totalorder %s23, 3
      %p141 = scmp.ne.s32.totalorder %s136, %s138
      %p142 = scmp.eq.s32.totalorder %s23, 0
      %p143 = por %p141, %p142
      %p144 = scmp.ne.s32.totalorder %s136, %s138
      %p145 = scmp.eq.s32.totalorder %s28, 3
      %p146 = por %p144, %p145
      %p147 = scmp.ne.s32.totalorder %s138, %s139
      %p148 = scmp.eq.s32.totalorder %s28, 0
      %p149 = por %p147, %p148
      %p150 = scmp.ne.s32.totalorder %s138, %s139
      %p151 = scmp.eq.s32.totalorder %s29, 3
      %p152 = por %p150, %p151
      %p154 = scmp.ne.s32.totalorder %s139, %s153
      %p155 = scmp.eq.s32.totalorder %s29, 0
      %p156 = por %p154, %p155
      %s158 = sadd.s32 %s157, 1
      %p161 = scmp.eq.s32.totalorder %s23, 3
      %p162 = scmp.ne.s32.totalorder %s157, %s159
      %p163 = scmp.eq.s32.totalorder %s23, 0
      %p164 = por %p162, %p163
      %p165 = scmp.ne.s32.totalorder %s157, %s159
      %p166 = scmp.eq.s32.totalorder %s28, 3
      %p167 = por %p165, %p166
      %p168 = scmp.ne.s32.totalorder %s159, %s160
      %p169 = scmp.eq.s32.totalorder %s28, 0
      %p170 = por %p168, %p169
      %p171 = scmp.ne.s32.totalorder %s159, %s160
      %p172 = scmp.eq.s32.totalorder %s29, 3
      %p173 = por %p171, %p172
      %p175 = scmp.ne.s32.totalorder %s160, %s174
      %p176 = scmp.eq.s32.totalorder %s29, 0
      %p177 = por %p175, %p176
      %s179 = sadd.s32 %s178, 1
      %p182 = scmp.eq.s32.totalorder %s23, 3
      %p183 = scmp.ne.s32.totalorder %s178, %s180
      %p184 = scmp.eq.s32.totalorder %s23, 0
      %p185 = por %p183, %p184
      %p186 = scmp.ne.s32.totalorder %s178, %s180
      %p187 = scmp.eq.s32.totalorder %s28, 3
      %p188 = por %p186, %p187
      %p189 = scmp.ne.s32.totalorder %s180, %s181
      %p190 = scmp.eq.s32.totalorder %s28, 0
      %p191 = por %p189, %p190
      %p192 = scmp.ne.s32.totalorder %s180, %s181
      %p193 = scmp.eq.s32.totalorder %s29, 3
      %p194 = por %p192, %p193
      %p196 = scmp.ne.s32.totalorder %s181, %s195
      %p197 = scmp.eq.s32.totalorder %s29, 0
      %p198 = por %p196, %p197
      %s200 = sadd.s32 %s199, 1
      %p203 = scmp.eq.s32.totalorder %s23, 3
      %p204 = scmp.ne.s32.totalorder %s199, %s201
      %p205 = scmp.eq.s32.totalorder %s23, 0
      %p206 = por %p204, %p205
      %p207 = scmp.ne.s32.totalorder %s199, %s201
      %p208 = scmp.eq.s32.totalorder %s28, 3
      %p209 = por %p207, %p208
      %p210 = scmp.ne.s32.totalorder %s201, %s202
      %p211 = scmp.eq.s32.totalorder %s28, 0
      %p212 = por %p210, %p211
      %p213 = scmp.ne.s32.totalorder %s201, %s202
      %p214 = scmp.eq.s32.totalorder %s29, 3
      %p215 = por %p213, %p214
      %p217 = scmp.ne.s32.totalorder %s202, %s216
      %p218 = scmp.eq.s32.totalorder %s29, 0
      %p219 = por %p217, %p218
      %s221 = sadd.s32 %s220, 1
      %p224 = scmp.eq.s32.totalorder %s23, 3
      %p225 = scmp.ne.s32.totalorder %s220, %s222
      %p226 = scmp.eq.s32.totalorder %s23, 0
      %p227 = por %p225, %p226
      %p228 = scmp.ne.s32.totalorder %s220, %s222
      %p229 = scmp.eq.s32.totalorder %s28, 3
      %p230 = por %p228, %p229
      %p231 = scmp.ne.s32.totalorder %s222, %s223
      %p232 = scmp.eq.s32.totalorder %s28, 0
      %p233 = por %p231, %p232
      %p234 = scmp.ne.s32.totalorder %s222, %s223
      %p235 = scmp.eq.s32.totalorder %s29, 3
      %p236 = por %p234, %p235
      %p238 = scmp.ne.s32.totalorder %s223, %s237
      %p239 = scmp.eq.s32.totalorder %s29, 0
      %p240 = por %p238, %p239
      %s241 = smul.u32 %s30, %s31
      %s242 = ssub.s32 1, %s30
      %s243 = smul.u32 %s242, 2
      %s244 = sadd.s32 %s241, %s243
      %s245 = smul.u32 %s42, %s38
      %s246 = ssub.s32 1, %s42
      %s247 = smul.u32 %s246, 2
      %s248 = sadd.s32 %s245, %s247
      %s249 = ssub.s32 %s244, %s248
      %p250 = scmp.eq.s32.totalorder %s249, 0
      %s252 = sadd.s32 %s251, 1
      %s253 = scalar_select %p250, %s251, %s252
      %p256 = pneg %p250
      %p257 = scmp.eq.s32.totalorder %s23, 3
      %p258 = por %p256, %p257
      %p259 = scmp.ne.s32.totalorder %s251, %s254
      %p260 = scmp.eq.s32.totalorder %s23, 0
      %p261 = por %p259, %p260
      %p262 = scmp.ne.s32.totalorder %s251, %s254
      %p263 = scmp.eq.s32.totalorder %s28, 3
      %p264 = por %p262, %p263
      %p265 = scmp.ne.s32.totalorder %s254, %s255
      %p266 = scmp.eq.s32.totalorder %s28, 0
      %p267 = por %p265, %p266
      %p268 = scmp.ne.s32.totalorder %s254, %s255
      %p269 = scmp.eq.s32.totalorder %s29, 3
      %p270 = por %p268, %p269
      %p272 = scmp.ne.s32.totalorder %s255, %s271
      %p273 = scmp.eq.s32.totalorder %s29, 0
      %p274 = por %p272, %p273
      %p275 = scmp.le.s32.totalorder 1, %s23
      %p276 = scmp.lt.s32.totalorder %s23, 5
      %p277 = pnand %p275, %p276
      %p278 = pneg %p277
      // Predicated region
      $region9: #{tpu_custom_call.1} parent=5 // pred_check
        _
      $region10: #{tpu_custom_call.1} parent=5 // pred_check_branch
        %280 = sbr.rel (%p277) target = $region12
      $region11: #{tpu_custom_call.1} parent=5 // pred_region
        %s281 = ssub.s32 %s23, 1
        // Predicated region
        $region13: #{tpu_custom_call.1} parent=11 // pred_check
          %p282 = pneg %p86
        $region14: #{tpu_custom_call.1} parent=11 // pred_check_branch
          %284 = sbr.rel (%p282) target = $region16
        $region15: #{tpu_custom_call.1} parent=11 // pred_region
          %s286 = ssub.s32 1024, 1024
          %287 = vsyncadd [#allocation11], %s286
          %s288 = sshll.u32 [#allocation10], 4
          %s289 = int_to_ptr.vmem [resolvable:$true] %s288
          %294 = dma.hbm_to_vmem [thread:$0]  %s1, 1024, %s289, [#allocation11], 64, 64, 4
        $region16: #{tpu_custom_call.1} parent=11 // pred_fallthru
          _
        // Predicated region
        $region17: #{tpu_custom_call.1} parent=11 // pred_check
          %p295 = pneg %p107
        $region18: #{tpu_custom_call.1} parent=11 // pred_check_branch
          %297 = sbr.rel (%p295) target = $region20
        $region19: #{tpu_custom_call.1} parent=11 // pred_region
          _
        $region20: #{tpu_custom_call.1} parent=11 // pred_fallthru
          _
        // Predicated region
        $region21: #{tpu_custom_call.1} parent=11 // pred_check
          %p298 = pneg %p128
        $region22: #{tpu_custom_call.1} parent=11 // pred_check_branch
          %300 = sbr.rel (%p298) target = $region24
        $region23: #{tpu_custom_call.1} parent=11 // pred_region
          _
        $region24: #{tpu_custom_call.1} parent=11 // pred_fallthru
          _
        // Predicated region
        $region25: #{tpu_custom_call.1} parent=11 // pred_check
          %p301 = pneg %p149
        $region26: #{tpu_custom_call.1} parent=11 // pred_check_branch
          %303 = sbr.rel (%p301) target = $region28
        $region27: #{tpu_custom_call.1} parent=11 // pred_region
          _
        $region28: #{tpu_custom_call.1} parent=11 // pred_fallthru
          _
        // Predicated region
        $region29: #{tpu_custom_call.1} parent=11 // pred_check
          %p304 = pneg %p170
        $region30: #{tpu_custom_call.1} parent=11 // pred_check_branch
          %306 = sbr.rel (%p304) target = $region32
        $region31: #{tpu_custom_call.1} parent=11 // pred_region
          %s308 = ssub.s32 1024, 1024
          %309 = vsyncadd [#allocation11], %s308
          %s310 = sshll.u32 [#allocation12], 4
          %s311 = int_to_ptr.vmem [resolvable:$true] %s310
          %316 = dma.hbm_to_vmem [thread:$0]  %s5, 1024, %s311, [#allocation11], 64, 64, 4
        $region32: #{tpu_custom_call.1} parent=11 // pred_fallthru
          _
        // Predicated region
        $region33: #{tpu_custom_call.1} parent=11 // pred_check
          %p317 = pneg %p191
        $region34: #{tpu_custom_call.1} parent=11 // pred_check_branch
          %319 = sbr.rel (%p317) target = $region36
        $region35: #{tpu_custom_call.1} parent=11 // pred_region
          _
        $region36: #{tpu_custom_call.1} parent=11 // pred_fallthru
          _
        // Predicated region
        $region37: #{tpu_custom_call.1} parent=11 // pred_check
          %p320 = pneg %p212
        $region38: #{tpu_custom_call.1} parent=11 // pred_check_branch
          %322 = sbr.rel (%p320) target = $region40
        $region39: #{tpu_custom_call.1} parent=11 // pred_region
          %s324 = ssub.s32 1024, 1024
          %325 = vsyncadd [#allocation14], %s324
          %s326 = sshll.u32 [#allocation13], 4
          %s327 = int_to_ptr.vmem [resolvable:$true] %s326
          %332 = dma.hbm_to_vmem [thread:$0]  %s7, 1024, %s327, [#allocation14], 64, 64, 4
        $region40: #{tpu_custom_call.1} parent=11 // pred_fallthru
          _
        // Predicated region
        $region41: #{tpu_custom_call.1} parent=11 // pred_check
          %p333 = pneg %p233
        $region42: #{tpu_custom_call.1} parent=11 // pred_check_branch
          %335 = sbr.rel (%p333) target = $region44
        $region43: #{tpu_custom_call.1} parent=11 // pred_region
          _
        $region44: #{tpu_custom_call.1} parent=11 // pred_fallthru
          _
      $region12: #{tpu_custom_call.1} parent=5 // pred_fallthru
        _
      %p336 = scmp.lt.s32.totalorder %s23, 4
      // Predicated region
      $region45: #{tpu_custom_call.1} parent=5 // pred_check
        %p337 = pneg %p336
      $region46: #{tpu_custom_call.1} parent=5 // pred_check_branch
        %339 = sbr.rel (%p337) target = $region48
      $region47: #{tpu_custom_call.1} parent=5 // pred_region
        // Predicated region
        $region49: #{tpu_custom_call.1} parent=47 // pred_check
          %p340 = pneg %p59
        $region50: #{tpu_custom_call.1} parent=47 // pred_check_branch
          %342 = sbr.rel (%p340) target = $region52
        $region51: #{tpu_custom_call.1} parent=47 // pred_region
          %s343 = sand.u32 %s49, 1
          %s344 = scalar_lea.sflag [#allocation8], %s343
          %s345 = sand.u32 %s49, 1
          %s346 = smul.addr %s345, 32
          %s347 = scalar_lea.vmem [#allocation7], %s346
          %s348 = ssub.s32 1, %s30
          %s349 = smul.u32 %s31, %s348
          %s350 = smul.u32 8, %s349
          %s352 = ssub.s32 512, 512
          %353 = vsyncadd %s344, %s352
          %s354 = smul.addr %s350, 64
          %s355 = scalar_lea.hbm %s0, %s354
          %s356 = sshll.u32 %s347, 4
          %s357 = int_to_ptr.vmem [resolvable:$true] %s356
          %362 = dma.hbm_to_vmem [thread:$0]  %s355, 512, %s357, %s344, 64, 64, 4
        $region52: #{tpu_custom_call.1} parent=47 // pred_fallthru
          _
      $region48: #{tpu_custom_call.1} parent=5 // pred_fallthru
        _
      %p363 = scmp.le.s32.totalorder 1, %s23
      %p364 = scmp.lt.s32.totalorder %s23, 5
      %p365 = pnand %p363, %p364
      %p366 = pneg %p365
      // Predicated region
      $region53: #{tpu_custom_call.1} parent=5 // pred_check
        _
      $region54: #{tpu_custom_call.1} parent=5 // pred_check_branch
        %368 = sbr.rel (%p365) target = $region56
      $region55: #{tpu_custom_call.1} parent=5 // pred_region
        %s369 = ssub.s32 %s23, 1
        %s370 = sand.u32 %s52, 1
        %s371 = scalar_lea.sflag [#allocation8], %s370
        %s372 = sand.u32 %s52, 1
        %s373 = smul.addr %s372, 32
        %s374 = scalar_lea.vmem [#allocation7], %s373
        // Predicated region
        $region57: #{tpu_custom_call.1} parent=55 // pred_check
          %p375 = pneg %p65
        $region58: #{tpu_custom_call.1} parent=55 // pred_check_branch
          %377 = sbr.rel (%p375) target = $region60
        $region59: #{tpu_custom_call.1} parent=55 // pred_region
          %378 = dma.done %s371, 512
        $region60: #{tpu_custom_call.1} parent=55 // pred_fallthru
          _
        // Predicated region
        $region61: #{tpu_custom_call.1} parent=55 // pred_check
          %p379 = pneg %p86
        $region62: #{tpu_custom_call.1} parent=55 // pred_check_branch
          %381 = sbr.rel (%p379) target = $region64
        $region63: #{tpu_custom_call.1} parent=55 // pred_region
          %382 = dma.done [#allocation11], 1024
        $region64: #{tpu_custom_call.1} parent=55 // pred_fallthru
          _
        // Predicated region
        $region65: #{tpu_custom_call.1} parent=55 // pred_check
          %p383 = pneg %p170
        $region66: #{tpu_custom_call.1} parent=55 // pred_check_branch
          %385 = sbr.rel (%p383) target = $region68
        $region67: #{tpu_custom_call.1} parent=55 // pred_region
          %386 = dma.done [#allocation11], 1024
        $region68: #{tpu_custom_call.1} parent=55 // pred_fallthru
          _
        // Predicated region
        $region69: #{tpu_custom_call.1} parent=55 // pred_check
          %p387 = pneg %p212
        $region70: #{tpu_custom_call.1} parent=55 // pred_check_branch
          %389 = sbr.rel (%p387) target = $region72
        $region71: #{tpu_custom_call.1} parent=55 // pred_region
          %390 = dma.done [#allocation14], 1024
        $region72: #{tpu_custom_call.1} parent=55 // pred_fallthru
          _
        %s391 = sand.u32 %s52, 1
        %s392 = scalar_lea.sflag [#allocation8], %s391
        %s393 = sand.u32 %s52, 1
        %s394 = smul.addr %s393, 32
        %s395 = scalar_lea.vmem [#allocation7], %s394
        %p396 = pneg %p65
        %p397 = pneg %p62
        %p398 = pneg %p86
        %p399 = pneg %p83
        %p400 = pneg %p107
        %p401 = pneg %p104
        %p402 = pneg %p128
        %p403 = pneg %p125
        %p404 = pneg %p149
        %p405 = pneg %p146
        %p406 = pneg %p170
        %p407 = pneg %p167
        %p408 = pneg %p191
        %p409 = pneg %p188
        %p410 = pneg %p212
        %p411 = pneg %p209
        %p412 = pneg %p233
        %p413 = pneg %p230
        %p414 = pneg %p267
        %p415 = pneg %p264
        %s416 = sand.u32 %s254, 1
        %s417 = scalar_lea.sflag [#allocation9], %s416
        %s418 = sand.u32 %s254, 1
        %s419 = smul.addr %s418, 64
        %s420 = scalar_lea.vmem [#allocation15], %s419
        %s421 = ssub.s32 1, %s32
        %s422 = smul.u32 %s33, %s421
        %s423 = smul.u32 8, %s422
        %s424 = smul.u32 %s32, %s33
        %s425 = ssub.s32 1, %s32
        %s426 = smul.u32 %s425, 2
        %s427 = sadd.s32 %s424, %s426
        %s428 = smul.u32 8, %s427
        %p430 = scmp.eq.s32.totalorder %s32, 0
        // Predicated region
        $region73: #{tpu_custom_call.1} parent=55 // pred_check
          %p431 = pneg %p430
        $region74: #{tpu_custom_call.1} parent=55 // pred_check_branch
          %433 = sbr.rel (%p431) target = $region76
        $region75: #{tpu_custom_call.1} parent=55 // pred_region
          %p434 = scmp.eq.s32.totalorder %s33, 0
          // Predicated region
          $region77: #{tpu_custom_call.1} parent=75 // pred_check
            %p435 = pneg %p434
          $region78: #{tpu_custom_call.1} parent=75 // pred_check_branch
            %437 = sbr.rel (%p435) target = $region80
          $region79: #{tpu_custom_call.1} parent=75 // pred_region
            %438 = vst [vmem:[#allocation2] sm:$0x1] 0.0
            %439 = vst [vmem:[#allocation3] sm:$0x1] 0.0
          $region80: #{tpu_custom_call.1} parent=75 // pred_fallthru
            _
          %v440 = vld [vmem:[%s374] sm:$0xf]
          %v441 = vld [vmem:[%s374 + $0x4] sm:$0xf]
          %v442 = vld [vmem:[%s374 + $0x8] sm:$0xf]
          %v443 = vld [vmem:[%s374 + $0xc] sm:$0xf]
          %v444 = vld [vmem:[%s374 + $0x10] sm:$0xf]
          %v445 = vld [vmem:[%s374 + $0x14] sm:$0xf]
          %v446 = vld [vmem:[%s374 + $0x18] sm:$0xf]
          %v447 = vld [vmem:[%s374 + $0x1c] sm:$0xf]
          %v448 = vld [vmem:[#allocation10] sm:$0xf]
          %v449 = vld [vmem:[#allocation10 + $0x4] sm:$0xf]
          %v450 = vld [vmem:[#allocation10 + $0x8] sm:$0xf]
          %v451 = vld [vmem:[#allocation10 + $0xc] sm:$0xf]
          %v452 = vld [vmem:[#allocation10 + $0x10] sm:$0xf]
          %v453 = vld [vmem:[#allocation10 + $0x14] sm:$0xf]
          %v454 = vld [vmem:[#allocation10 + $0x18] sm:$0xf]
          %v455 = vld [vmem:[#allocation10 + $0x1c] sm:$0xf]
          %v456 = vld [vmem:[#allocation10 + $0x20] sm:$0xf]
          %v457 = vld [vmem:[#allocation10 + $0x24] sm:$0xf]
          %v458 = vld [vmem:[#allocation10 + $0x28] sm:$0xf]
          %v459 = vld [vmem:[#allocation10 + $0x2c] sm:$0xf]
          %v460 = vld [vmem:[#allocation10 + $0x30] sm:$0xf]
          %v461 = vld [vmem:[#allocation10 + $0x34] sm:$0xf]
          %v462 = vld [vmem:[#allocation10 + $0x38] sm:$0xf]
          %v463 = vld [vmem:[#allocation10 + $0x3c] sm:$0xf]
          %v464 = vld [vmem:[%s2] sm:$0x1]
          %v466 = vlaneseq
          %v467 = vshrl.u32 %v466, 7
          %v468 = vsub.s32 0, %v467
          %v469 = vrot.slane %v464, %v468
          %v479 = vunpack.c.l.b16 %v440
          %v480 = vunpack.c.l.b16 %v441
          %v481 = vunpack.c.l.b16 %v442
          %v482 = vunpack.c.l.b16 %v443
          %v483 = vunpack.c.l.b16 %v444
          %v484 = vunpack.c.l.b16 %v445
          %v485 = vunpack.c.l.b16 %v446
          %v486 = vunpack.c.l.b16 %v447
          %v487 = vpack.c.b16 %v480, %v479
          %v488 = vpack.c.b16 %v482, %v481
          %v489 = vpack.c.b16 %v484, %v483
          %v490 = vpack.c.b16 %v486, %v485
          %v511 = vunpack.c.l.b16 %v448
          %v512 = vunpack.c.l.b16 %v449
          %v513 = vunpack.c.l.b16 %v450
          %v514 = vunpack.c.l.b16 %v451
          %v515 = vunpack.c.l.b16 %v452
          %v516 = vunpack.c.l.b16 %v453
          %v517 = vunpack.c.l.b16 %v454
          %v518 = vunpack.c.l.b16 %v455
          %v519 = vunpack.c.l.b16 %v456
          %v520 = vunpack.c.l.b16 %v457
          %v521 = vunpack.c.l.b16 %v458
          %v522 = vunpack.c.l.b16 %v459
          %v523 = vunpack.c.l.b16 %v460
          %v524 = vunpack.c.l.b16 %v461
          %v525 = vunpack.c.l.b16 %v462
          %v526 = vunpack.c.l.b16 %v463
          %v527 = vpack.c.b16 %v512, %v511
          %v528 = vpack.c.b16 %v514, %v513
          %v529 = vpack.c.b16 %v516, %v515
          %v530 = vpack.c.b16 %v518, %v517
          %v531 = vpack.c.b16 %v520, %v519
          %v532 = vpack.c.b16 %v522, %v521
          %v533 = vpack.c.b16 %v524, %v523
          %v534 = vpack.c.b16 %v526, %v525
          %543 = vmatprep.subr.bf16.mxu0 0
          %544 = vmatpush1.bf16.msra.mxu0 %v534
          %545 = vmatprep.subr.bf16.mxu0 0
          %546 = vmatpush1.bf16.msra.mxu0 %v533
          %547 = vmatprep.subr.bf16.mxu0 0
          %548 = vmatpush1.bf16.msra.mxu0 %v532
          %549 = vmatprep.subr.bf16.mxu0 0
          %550 = vmatpush1.bf16.msra.mxu0 %v531
          %551 = vmatprep.subr.bf16.mxu0 0
          %552 = vmatpush1.bf16.msra.mxu0 %v530
          %553 = vmatprep.subr.bf16.mxu0 0
          %554 = vmatpush1.bf16.msra.mxu0 %v529
          %555 = vmatprep.subr.bf16.mxu0 0
          %556 = vmatpush1.bf16.msra.mxu0 %v528
          %557 = vmatprep.subr.bf16.mxu0 0
          %558 = vmatpush1.bf16.msra.mxu0 %v527
          %559 = vmatprep.subr.bf16.mxu0 0
          %560 = vmatpush2.bf16.msra.mxu0 0
          %561 = vmatprep.subr.bf16.mxu0 0
          %562 = vmatpush2.bf16.msra.mxu0 0
          %563 = vmatprep.subr.bf16.mxu0 0
          %564 = vmatpush2.bf16.msra.mxu0 0
          %565 = vmatprep.subr.bf16.mxu0 0
          %566 = vmatpush2.bf16.msra.mxu0 0
          %567 = vmatprep.subr.bf16.mxu0 0
          %568 = vmatpush2.bf16.msra.mxu0 0
          %569 = vmatprep.subr.bf16.mxu0 0
          %570 = vmatpush2.bf16.msra.mxu0 0
          %571 = vmatprep.subr.bf16.mxu0 0
          %572 = vmatpush2.bf16.msra.mxu0 0
          %573 = vmatprep.subr.bf16.mxu0 0
          %574 = vmatpush2.bf16.msra.mxu0 0
          %575 = vmatprep.mubr.bf16.mxu0 0
          %576 = vmatmul.mubr.bf16.gmra.mxu0 %v487
          %v577 = vpop.f32.mrf.mxu0
          %v578 = vadd.f32 %v469, %v577
          %v579 = vpop.f32.mrf.mxu0
          %v580 = vpop.f32.mrf.mxu0
          %v581 = vadd.f32 %v469, %v580
          %v582 = vpop.f32.mrf.mxu0
          %583 = vmatprep.mubr.bf16.mxu0 0
          %584 = vmatmul.mubr.bf16.gmra.mxu0 %v488
          %v585 = vpop.f32.mrf.mxu0
          %v586 = vadd.f32 %v469, %v585
          %v587 = vpop.f32.mrf.mxu0
          %v588 = vpop.f32.mrf.mxu0
          %v589 = vadd.f32 %v469, %v588
          %v590 = vpop.f32.mrf.mxu0
          %591 = vmatprep.mubr.bf16.mxu0 0
          %592 = vmatmul.mubr.bf16.gmra.mxu0 %v489
          %v593 = vpop.f32.mrf.mxu0
          %v594 = vadd.f32 %v469, %v593
          %v595 = vpop.f32.mrf.mxu0
          %v596 = vpop.f32.mrf.mxu0
          %v597 = vadd.f32 %v469, %v596
          %v598 = vpop.f32.mrf.mxu0
          %599 = vmatprep.mubr.bf16.mxu0 0
          %600 = vmatmul.mubr.bf16.gmra.mxu0 %v490
          %v601 = vpop.f32.mrf.mxu0
          %v602 = vadd.f32 %v469, %v601
          %v603 = vpop.f32.mrf.mxu0
          %v604 = vpop.f32.mrf.mxu0
          %v605 = vadd.f32 %v469, %v604
          %v606 = vpop.f32.mrf.mxu0
          %607 = vdwg.mxu0
          %v608 = vmax.f32 %v578, 0.0
          %v609 = vmax.f32 %v581, 0.0
          %v610 = vmax.f32 %v586, 0.0
          %v611 = vmax.f32 %v589, 0.0
          %v612 = vmax.f32 %v594, 0.0
          %v613 = vmax.f32 %v597, 0.0
          %v614 = vmax.f32 %v602, 0.0
          %v615 = vmax.f32 %v605, 0.0
          %v616 = vld [vmem:[#allocation2] sm:$0x1]
          %v617 = vadd.f32 %v608, %v609
          %v618 = vadd.f32 %v617, %v610
          %v619 = vadd.f32 %v618, %v611
          %v620 = vadd.f32 %v619, %v612
          %v621 = vadd.f32 %v620, %v613
          %v622 = vadd.f32 %v621, %v614
          %v623 = vadd.f32 %v622, %v615
          %v624 = vrot.slane %v623, 4
          %v625 = vadd.f32 %v623, %v624
          %v626 = vrot.slane %v625, 2
          %v627 = vadd.f32 %v625, %v626
          %v628 = vrot.slane %v627, 1
          %v629 = vadd.f32 %v627, %v628
          %v630 = vadd.f32 %v616, %v629
          %631 = vst [vmem:[#allocation2] sm:$0x1] %v630
          %s632 = smul.u32 %s33, 64
          %s633 = scalar_lea.vmem [#allocation6], %s632
          %634 = vst [vmem:[%s633] sm:$0xff] %v608
          %635 = vst [vmem:[%s633 + $0x8] sm:$0xff] %v609
          %636 = vst [vmem:[%s633 + $0x10] sm:$0xff] %v610
          %637 = vst [vmem:[%s633 + $0x18] sm:$0xff] %v611
          %638 = vst [vmem:[%s633 + $0x20] sm:$0xff] %v612
          %639 = vst [vmem:[%s633 + $0x28] sm:$0xff] %v613
          %640 = vst [vmem:[%s633 + $0x30] sm:$0xff] %v614
          %641 = vst [vmem:[%s633 + $0x38] sm:$0xff] %v615
          %p642 = scmp.eq.s32.totalorder %s33, 1
          // Predicated region
          $region81: #{tpu_custom_call.1} parent=75 // pred_check
            %p643 = pneg %p642
          $region82: #{tpu_custom_call.1} parent=75 // pred_check_branch
            %645 = sbr.rel (%p643) target = $region84
          $region83: #{tpu_custom_call.1} parent=75 // pred_region
            %v646 = vld [vmem:[%s2] sm:$0x1]
            %v647 = vmax.f32 %v646, 0.0
            %v648 = vld [vmem:[#allocation2] sm:$0x1]
            %v649 = vmul.f32 %v647, 8.0
            %v650 = vsub.f32 %v648, %v649
            %v651 = vmul.f32 %v650, 0.008333334
            loop: start=0, step=1, limit=2
            $region85: #{tpu_custom_call.1} parent=83 // loop_pre_header
              _
            $region86: #{tpu_custom_call.1} parent=83 // loop_header
              %s653 = sphi 0, %s657
              %p654 = scmp.ge.s32.totalorder %s653, 2
              %v658 = vphi 0.0, %v704
            $region87: #{tpu_custom_call.1} parent=83 // loop_header_branch
              %656 = sbr.rel (%p654) target = $region91
            $region88: #{tpu_custom_call.1} parent=83 // loop_body
              %s659 = smul.u32 %s653, 64
              %s660 = scalar_lea.vmem [#allocation6], %s659
              %v661 = vld [vmem:[%s660] sm:$0xff]
              %v662 = vld [vmem:[%s660 + $0x8] sm:$0xff]
              %v663 = vld [vmem:[%s660 + $0x10] sm:$0xff]
              %v664 = vld [vmem:[%s660 + $0x18] sm:$0xff]
              %v665 = vld [vmem:[%s660 + $0x20] sm:$0xff]
              %v666 = vld [vmem:[%s660 + $0x28] sm:$0xff]
              %v667 = vld [vmem:[%s660 + $0x30] sm:$0xff]
              %v668 = vld [vmem:[%s660 + $0x38] sm:$0xff]
              %v670 = vlaneseq
              %v671 = vshrl.u32 %v670, 7
              %v672 = vsub.s32 0, %v671
              %v673 = vrot.slane %v651, %v672
              %v675 = vsub.f32 %v661, %v673
              %v676 = vsub.f32 %v662, %v673
              %v677 = vsub.f32 %v663, %v673
              %v678 = vsub.f32 %v664, %v673
              %v679 = vsub.f32 %v665, %v673
              %v680 = vsub.f32 %v666, %v673
              %v681 = vsub.f32 %v667, %v673
              %v682 = vsub.f32 %v668, %v673
              %v683 = vmul.f32 %v675, %v675
              %v684 = vmul.f32 %v676, %v676
              %v685 = vmul.f32 %v677, %v677
              %v686 = vmul.f32 %v678, %v678
              %v687 = vmul.f32 %v679, %v679
              %v688 = vmul.f32 %v680, %v680
              %v689 = vmul.f32 %v681, %v681
              %v690 = vmul.f32 %v682, %v682
              %v691 = vadd.f32 %v683, %v684
              %v692 = vadd.f32 %v691, %v685
              %v693 = vadd.f32 %v692, %v686
              %v694 = vadd.f32 %v693, %v687
              %v695 = vadd.f32 %v694, %v688
              %v696 = vadd.f32 %v695, %v689
              %v697 = vadd.f32 %v696, %v690
              %v698 = vrot.slane %v697, 4
              %v699 = vadd.f32 %v697, %v698
              %v700 = vrot.slane %v699, 2
              %v701 = vadd.f32 %v699, %v700
              %v702 = vrot.slane %v701, 1
              %v703 = vadd.f32 %v701, %v702
              %v704 = vadd.f32 %v658, %v703
            $region89: #{tpu_custom_call.1} parent=83 // loop_footer
              %s657 = sadd.s32 1, %s653
            $region90: #{tpu_custom_call.1} parent=83 // loop_footer_branch
              %652 = sbr.rel target = $region86
            $region91: #{tpu_custom_call.1} parent=83 // loop_exit
              _
            %v705 = vsub.f32 %v647, %v651
            %v706 = vmul.f32 %v705, 8.0
            %v707 = vmul.f32 %v706, %v705
            %v708 = vsub.f32 %v658, %v707
            %v709 = vmul.f32 %v708, 0.008333334
            %v710 = vmax.f32 %v709, 0.0
            %v711 = vadd.f32 %v710, 1e-05
            %v712 = vrsqrt.pop %v711
            %v713 = vld [vmem:[%s3] sm:$0x1]
            %v714 = vmul.f32 %v712, %v713
            %715 = vst [vmem:[#allocation4] sm:$0x1] %v714
            %v716 = vld [vmem:[%s4] sm:$0x1]
            %v717 = vmul.f32 %v651, %v714
            %v718 = vsub.f32 %v716, %v717
            %719 = vst [vmem:[#allocation5] sm:$0x1] %v718
          $region84: #{tpu_custom_call.1} parent=75 // pred_fallthru
            _
        $region76: #{tpu_custom_call.1} parent=55 // pred_fallthru
          _
        %p720 = scmp.eq.s32.totalorder %s32, 1
        // Predicated region
        $region92: #{tpu_custom_call.1} parent=55 // pred_check
          %p721 = pneg %p720
        $region93: #{tpu_custom_call.1} parent=55 // pred_check_branch
          %723 = sbr.rel (%p721) target = $region95
        $region94: #{tpu_custom_call.1} parent=55 // pred_region
          %s724 = smul.u32 %s33, 64
          %s725 = scalar_lea.vmem [#allocation6], %s724
          %v726 = vld [vmem:[%s725] sm:$0xff]
          %v727 = vld [vmem:[%s725 + $0x8] sm:$0xff]
          %v728 = vld [vmem:[%s725 + $0x10] sm:$0xff]
          %v729 = vld [vmem:[%s725 + $0x18] sm:$0xff]
          %v730 = vld [vmem:[%s725 + $0x20] sm:$0xff]
          %v731 = vld [vmem:[%s725 + $0x28] sm:$0xff]
          %v732 = vld [vmem:[%s725 + $0x30] sm:$0xff]
          %v733 = vld [vmem:[%s725 + $0x38] sm:$0xff]
          %v734 = vld [vmem:[#allocation4] sm:$0x1]
          %v736 = vlaneseq
          %v737 = vshrl.u32 %v736, 7
          %v738 = vsub.s32 0, %v737
          %v739 = vrot.slane %v734, %v738
          %v741 = vmul.f32 %v726, %v739
          %v742 = vmul.f32 %v727, %v739
          %v743 = vmul.f32 %v728, %v739
          %v744 = vmul.f32 %v729, %v739
          %v745 = vmul.f32 %v730, %v739
          %v746 = vmul.f32 %v731, %v739
          %v747 = vmul.f32 %v732, %v739
          %v748 = vmul.f32 %v733, %v739
          %v749 = vld [vmem:[#allocation5] sm:$0x1]
          %v751 = vlaneseq
          %v752 = vshrl.u32 %v751, 7
          %v753 = vsub.s32 0, %v752
          %v754 = vrot.slane %v749, %v753
          %v756 = vadd.f32 %v741, %v754
          %v757 = vadd.f32 %v742, %v754
          %v758 = vadd.f32 %v743, %v754
          %v759 = vadd.f32 %v744, %v754
          %v760 = vadd.f32 %v745, %v754
          %v761 = vadd.f32 %v746, %v754
          %v762 = vadd.f32 %v747, %v754
          %v763 = vadd.f32 %v748, %v754
          %v764 = vpack.c.bf16 %v757, %v756
          %v765 = vpack.c.bf16 %v759, %v758
          %v766 = vpack.c.bf16 %v761, %v760
          %v767 = vpack.c.bf16 %v763, %v762
          %v768 = vld [vmem:[#allocation12] sm:$0xf]
          %v769 = vld [vmem:[#allocation12 + $0x4] sm:$0xf]
          %v770 = vld [vmem:[#allocation12 + $0x8] sm:$0xf]
          %v771 = vld [vmem:[#allocation12 + $0xc] sm:$0xf]
          %v772 = vld [vmem:[#allocation12 + $0x10] sm:$0xf]
          %v773 = vld [vmem:[#allocation12 + $0x14] sm:$0xf]
          %v774 = vld [vmem:[#allocation12 + $0x18] sm:$0xf]
          %v775 = vld [vmem:[#allocation12 + $0x1c] sm:$0xf]
          %v776 = vld [vmem:[#allocation12 + $0x20] sm:$0xf]
          %v777 = vld [vmem:[#allocation12 + $0x24] sm:$0xf]
          %v778 = vld [vmem:[#allocation12 + $0x28] sm:$0xf]
          %v779 = vld [vmem:[#allocation12 + $0x2c] sm:$0xf]
          %v780 = vld [vmem:[#allocation12 + $0x30] sm:$0xf]
          %v781 = vld [vmem:[#allocation12 + $0x34] sm:$0xf]
          %v782 = vld [vmem:[#allocation12 + $0x38] sm:$0xf]
          %v783 = vld [vmem:[#allocation12 + $0x3c] sm:$0xf]
          %v784 = vld [vmem:[%s6] sm:$0x1]
          %v786 = vlaneseq
          %v787 = vshrl.u32 %v786, 7
          %v788 = vsub.s32 0, %v787
          %v789 = vrot.slane %v784, %v788
          %v807 = vunpack.c.l.b16 %v768
          %v808 = vunpack.c.l.b16 %v769
          %v809 = vunpack.c.l.b16 %v770
          %v810 = vunpack.c.l.b16 %v771
          %v811 = vunpack.c.l.b16 %v772
          %v812 = vunpack.c.l.b16 %v773
          %v813 = vunpack.c.l.b16 %v774
          %v814 = vunpack.c.l.b16 %v775
          %v815 = vunpack.c.l.b16 %v776
          %v816 = vunpack.c.l.b16 %v777
          %v817 = vunpack.c.l.b16 %v778
          %v818 = vunpack.c.l.b16 %v779
          %v819 = vunpack.c.l.b16 %v780
          %v820 = vunpack.c.l.b16 %v781
          %v821 = vunpack.c.l.b16 %v782
          %v822 = vunpack.c.l.b16 %v783
          %v823 = vpack.c.b16 %v808, %v807
          %v824 = vpack.c.b16 %v810, %v809
          %v825 = vpack.c.b16 %v812, %v811
          %v826 = vpack.c.b16 %v814, %v813
          %v827 = vpack.c.b16 %v816, %v815
          %v828 = vpack.c.b16 %v818, %v817
          %v829 = vpack.c.b16 %v820, %v819
          %v830 = vpack.c.b16 %v822, %v821
          %839 = vmatprep.subr.bf16.mxu0 0
          %840 = vmatpush1.bf16.msra.mxu0 %v830
          %841 = vmatprep.subr.bf16.mxu0 0
          %842 = vmatpush1.bf16.msra.mxu0 %v829
          %843 = vmatprep.subr.bf16.mxu0 0
          %844 = vmatpush1.bf16.msra.mxu0 %v828
          %845 = vmatprep.subr.bf16.mxu0 0
          %846 = vmatpush1.bf16.msra.mxu0 %v827
          %847 = vmatprep.subr.bf16.mxu0 0
          %848 = vmatpush1.bf16.msra.mxu0 %v826
          %849 = vmatprep.subr.bf16.mxu0 0
          %850 = vmatpush1.bf16.msra.mxu0 %v825
          %851 = vmatprep.subr.bf16.mxu0 0
          %852 = vmatpush1.bf16.msra.mxu0 %v824
          %853 = vmatprep.subr.bf16.mxu0 0
          %854 = vmatpush1.bf16.msra.mxu0 %v823
          %855 = vmatprep.subr.bf16.mxu0 0
          %856 = vmatpush2.bf16.msra.mxu0 0
          %857 = vmatprep.subr.bf16.mxu0 0
          %858 = vmatpush2.bf16.msra.mxu0 0
          %859 = vmatprep.subr.bf16.mxu0 0
          %860 = vmatpush2.bf16.msra.mxu0 0
          %861 = vmatprep.subr.bf16.mxu0 0
          %862 = vmatpush2.bf16.msra.mxu0 0
          %863 = vmatprep.subr.bf16.mxu0 0
          %864 = vmatpush2.bf16.msra.mxu0 0
          %865 = vmatprep.subr.bf16.mxu0 0
          %866 = vmatpush2.bf16.msra.mxu0 0
          %867 = vmatprep.subr.bf16.mxu0 0
          %868 = vmatpush2.bf16.msra.mxu0 0
          %869 = vmatprep.subr.bf16.mxu0 0
          %870 = vmatpush2.bf16.msra.mxu0 0
          %871 = vmatprep.mubr.bf16.mxu0 0
          %872 = vmatmul.mubr.bf16.gmra.mxu0 %v764
          %v873 = vpop.f32.mrf.mxu0
          %v874 = vadd.f32 %v789, %v873
          %v875 = vpop.f32.mrf.mxu0
          %v876 = vpop.f32.mrf.mxu0
          %v877 = vadd.f32 %v789, %v876
          %v878 = vpop.f32.mrf.mxu0
          %879 = vmatprep.mubr.bf16.mxu0 0
          %880 = vmatmul.mubr.bf16.gmra.mxu0 %v765
          %v881 = vpop.f32.mrf.mxu0
          %v882 = vadd.f32 %v789, %v881
          %v883 = vpop.f32.mrf.mxu0
          %v884 = vpop.f32.mrf.mxu0
          %v885 = vadd.f32 %v789, %v884
          %v886 = vpop.f32.mrf.mxu0
          %887 = vmatprep.mubr.bf16.mxu0 0
          %888 = vmatmul.mubr.bf16.gmra.mxu0 %v766
          %v889 = vpop.f32.mrf.mxu0
          %v890 = vadd.f32 %v789, %v889
          %v891 = vpop.f32.mrf.mxu0
          %v892 = vpop.f32.mrf.mxu0
          %v893 = vadd.f32 %v789, %v892
          %v894 = vpop.f32.mrf.mxu0
          %895 = vmatprep.mubr.bf16.mxu0 0
          %896 = vmatmul.mubr.bf16.gmra.mxu0 %v767
          %v897 = vpop.f32.mrf.mxu0
          %v898 = vadd.f32 %v789, %v897
          %v899 = vpop.f32.mrf.mxu0
          %v900 = vpop.f32.mrf.mxu0
          %v901 = vadd.f32 %v789, %v900
          %v902 = vpop.f32.mrf.mxu0
          %903 = vdwg.mxu0
          %v904 = vmax.f32 %v874, 0.0
          %v905 = vmax.f32 %v877, 0.0
          %v906 = vmax.f32 %v882, 0.0
          %v907 = vmax.f32 %v885, 0.0
          %v908 = vmax.f32 %v890, 0.0
          %v909 = vmax.f32 %v893, 0.0
          %v910 = vmax.f32 %v898, 0.0
          %v911 = vmax.f32 %v901, 0.0
          %v912 = vpack.c.bf16 %v905, %v904
          %v913 = vpack.c.bf16 %v907, %v906
          %v914 = vpack.c.bf16 %v909, %v908
          %v915 = vpack.c.bf16 %v911, %v910
          %v916 = vld [vmem:[#allocation13] sm:$0xf]
          %v917 = vld [vmem:[#allocation13 + $0x4] sm:$0xf]
          %v918 = vld [vmem:[#allocation13 + $0x8] sm:$0xf]
          %v919 = vld [vmem:[#allocation13 + $0xc] sm:$0xf]
          %v920 = vld [vmem:[#allocation13 + $0x10] sm:$0xf]
          %v921 = vld [vmem:[#allocation13 + $0x14] sm:$0xf]
          %v922 = vld [vmem:[#allocation13 + $0x18] sm:$0xf]
          %v923 = vld [vmem:[#allocation13 + $0x1c] sm:$0xf]
          %v924 = vld [vmem:[#allocation13 + $0x20] sm:$0xf]
          %v925 = vld [vmem:[#allocation13 + $0x24] sm:$0xf]
          %v926 = vld [vmem:[#allocation13 + $0x28] sm:$0xf]
          %v927 = vld [vmem:[#allocation13 + $0x2c] sm:$0xf]
          %v928 = vld [vmem:[#allocation13 + $0x30] sm:$0xf]
          %v929 = vld [vmem:[#allocation13 + $0x34] sm:$0xf]
          %v930 = vld [vmem:[#allocation13 + $0x38] sm:$0xf]
          %v931 = vld [vmem:[#allocation13 + $0x3c] sm:$0xf]
          %v932 = vld [vmem:[%s8] sm:$0x1]
          %v934 = vlaneseq
          %v935 = vshrl.u32 %v934, 7
          %v936 = vsub.s32 0, %v935
          %v937 = vrot.slane %v932, %v936
          %v955 = vunpack.c.l.b16 %v916
          %v956 = vunpack.c.l.b16 %v917
          %v957 = vunpack.c.l.b16 %v918
          %v958 = vunpack.c.l.b16 %v919
          %v959 = vunpack.c.l.b16 %v920
          %v960 = vunpack.c.l.b16 %v921
          %v961 = vunpack.c.l.b16 %v922
          %v962 = vunpack.c.l.b16 %v923
          %v963 = vunpack.c.l.b16 %v924
          %v964 = vunpack.c.l.b16 %v925
          %v965 = vunpack.c.l.b16 %v926
          %v966 = vunpack.c.l.b16 %v927
          %v967 = vunpack.c.l.b16 %v928
          %v968 = vunpack.c.l.b16 %v929
          %v969 = vunpack.c.l.b16 %v930
          %v970 = vunpack.c.l.b16 %v931
          %v971 = vpack.c.b16 %v956, %v955
          %v972 = vpack.c.b16 %v958, %v957
          %v973 = vpack.c.b16 %v960, %v959
          %v974 = vpack.c.b16 %v962, %v961
          %v975 = vpack.c.b16 %v964, %v963
          %v976 = vpack.c.b16 %v966, %v965
          %v977 = vpack.c.b16 %v968, %v967
          %v978 = vpack.c.b16 %v970, %v969
          %987 = vmatprep.subr.bf16.mxu0 0
          %988 = vmatpush1.bf16.msra.mxu0 %v978
          %989 = vmatprep.subr.bf16.mxu0 0
          %990 = vmatpush1.bf16.msra.mxu0 %v977
          %991 = vmatprep.subr.bf16.mxu0 0
          %992 = vmatpush1.bf16.msra.mxu0 %v976
          %993 = vmatprep.subr.bf16.mxu0 0
          %994 = vmatpush1.bf16.msra.mxu0 %v975
          %995 = vmatprep.subr.bf16.mxu0 0
          %996 = vmatpush1.bf16.msra.mxu0 %v974
          %997 = vmatprep.subr.bf16.mxu0 0
          %998 = vmatpush1.bf16.msra.mxu0 %v973
          %999 = vmatprep.subr.bf16.mxu0 0
          %1000 = vmatpush1.bf16.msra.mxu0 %v972
          %1001 = vmatprep.subr.bf16.mxu0 0
          %1002 = vmatpush1.bf16.msra.mxu0 %v971
          %1003 = vmatprep.subr.bf16.mxu0 0
          %1004 = vmatpush2.bf16.msra.mxu0 0
          %1005 = vmatprep.subr.bf16.mxu0 0
          %1006 = vmatpush2.bf16.msra.mxu0 0
          %1007 = vmatprep.subr.bf16.mxu0 0
          %1008 = vmatpush2.bf16.msra.mxu0 0
          %1009 = vmatprep.subr.bf16.mxu0 0
          %1010 = vmatpush2.bf16.msra.mxu0 0
          %1011 = vmatprep.subr.bf16.mxu0 0
          %1012 = vmatpush2.bf16.msra.mxu0 0
          %1013 = vmatprep.subr.bf16.mxu0 0
          %1014 = vmatpush2.bf16.msra.mxu0 0
          %1015 = vmatprep.subr.bf16.mxu0 0
          %1016 = vmatpush2.bf16.msra.mxu0 0
          %1017 = vmatprep.subr.bf16.mxu0 0
          %1018 = vmatpush2.bf16.msra.mxu0 0
          %1019 = vmatprep.mubr.bf16.mxu0 0
          %1020 = vmatmul.mubr.bf16.gmra.mxu0 %v912
          %v1021 = vpop.f32.mrf.mxu0
          %v1022 = vadd.f32 %v937, %v1021
          %v1023 = vpop.f32.mrf.mxu0
          %v1024 = vpop.f32.mrf.mxu0
          %v1025 = vadd.f32 %v937, %v1024
          %v1026 = vpop.f32.mrf.mxu0
          %1027 = vmatprep.mubr.bf16.mxu0 0
          %1028 = vmatmul.mubr.bf16.gmra.mxu0 %v913
          %v1029 = vpop.f32.mrf.mxu0
          %v1030 = vadd.f32 %v937, %v1029
          %v1031 = vpop.f32.mrf.mxu0
          %v1032 = vpop.f32.mrf.mxu0
          %v1033 = vadd.f32 %v937, %v1032
          %v1034 = vpop.f32.mrf.mxu0
          %1035 = vmatprep.mubr.bf16.mxu0 0
          %1036 = vmatmul.mubr.bf16.gmra.mxu0 %v914
          %v1037 = vpop.f32.mrf.mxu0
          %v1038 = vadd.f32 %v937, %v1037
          %v1039 = vpop.f32.mrf.mxu0
          %v1040 = vpop.f32.mrf.mxu0
          %v1041 = vadd.f32 %v937, %v1040
          %v1042 = vpop.f32.mrf.mxu0
          %1043 = vmatprep.mubr.bf16.mxu0 0
          %1044 = vmatmul.mubr.bf16.gmra.mxu0 %v915
          %v1045 = vpop.f32.mrf.mxu0
          %v1046 = vadd.f32 %v937, %v1045
          %v1047 = vpop.f32.mrf.mxu0
          %v1048 = vpop.f32.mrf.mxu0
          %v1049 = vadd.f32 %v937, %v1048
          %v1050 = vpop.f32.mrf.mxu0
          %1051 = vdwg.mxu0
          %1052 = vst [vmem:[%s420] sm:$0xff] %v1022
          %1053 = vst [vmem:[%s420 + $0x8] sm:$0xff] %v1025
          %1054 = vst [vmem:[%s420 + $0x10] sm:$0xff] %v1030
          %1055 = vst [vmem:[%s420 + $0x18] sm:$0xff] %v1033
          %1056 = vst [vmem:[%s420 + $0x20] sm:$0xff] %v1038
          %1057 = vst [vmem:[%s420 + $0x28] sm:$0xff] %v1041
          %1058 = vst [vmem:[%s420 + $0x30] sm:$0xff] %v1046
          %1059 = vst [vmem:[%s420 + $0x38] sm:$0xff] %v1049
        $region95: #{tpu_custom_call.1} parent=55 // pred_fallthru
          _
        %s1060 = sand.u32 %s254, 1
        %s1061 = scalar_lea.sflag [#allocation9], %s1060
        %s1062 = sand.u32 %s254, 1
        %s1063 = smul.addr %s1062, 64
        %s1064 = scalar_lea.vmem [#allocation15], %s1063
        // Predicated region
        $region96: #{tpu_custom_call.1} parent=55 // pred_check
          %p1065 = pneg %p264
        $region97: #{tpu_custom_call.1} parent=55 // pred_check_branch
          %1067 = sbr.rel (%p1065) target = $region99
        $region98: #{tpu_custom_call.1} parent=55 // pred_region
          %s1068 = smul.u32 %s32, %s33
          %s1069 = ssub.s32 1, %s32
          %s1070 = smul.u32 %s1069, 2
          %s1071 = sadd.s32 %s1068, %s1070
          %s1072 = smul.u32 8, %s1071
          %s1074 = ssub.s32 1024, 1024
          %1075 = vsyncadd %s1061, %s1074
          %s1076 = smul.addr %s1072, 128
          %s1077 = scalar_lea.hbm %s9, %s1076
          %s1078 = sshll.u32 %s1064, 4
          %s1079 = int_to_ptr.vmem [resolvable:$true] %s1078
          %1084 = dma.vmem_to_hbm [thread:$0]  %s1079, 1024, %s1077, %s1061, 128, 128, 8
        $region99: #{tpu_custom_call.1} parent=55 // pred_fallthru
          _
      $region56: #{tpu_custom_call.1} parent=5 // pred_fallthru
        _
      %p1085 = scmp.le.s32.totalorder 2, %s23
      // Predicated region
      $region100: #{tpu_custom_call.1} parent=5 // pred_check
        %p1086 = pneg %p1085
      $region101: #{tpu_custom_call.1} parent=5 // pred_check_branch
        %1088 = sbr.rel (%p1086) target = $region103
      $region102: #{tpu_custom_call.1} parent=5 // pred_region
        %s1089 = ssub.s32 %s23, 2
        // Predicated region
        $region104: #{tpu_custom_call.1} parent=102 // pred_check
          %p1090 = pneg %p270
        $region105: #{tpu_custom_call.1} parent=102 // pred_check_branch
          %1092 = sbr.rel (%p1090) target = $region107
        $region106: #{tpu_custom_call.1} parent=102 // pred_region
          %s1093 = sand.u32 %s255, 1
          %s1094 = scalar_lea.sflag [#allocation9], %s1093
          %s1095 = sand.u32 %s255, 1
          %s1096 = smul.addr %s1095, 64
          %s1097 = scalar_lea.vmem [#allocation15], %s1096
          %1098 = dma.done %s1094, 1024
        $region107: #{tpu_custom_call.1} parent=102 // pred_fallthru
          _
      $region103: #{tpu_custom_call.1} parent=5 // pred_fallthru
        _
    $region6: #{tpu_custom_call.1} parent=1 // loop_footer
      %s27 = sadd.s32 1, %s23
    $region7: #{tpu_custom_call.1} parent=1 // loop_footer_branch
      %22 = sbr.rel target = $region3
    $region8: #{tpu_custom_call.1} parent=1 // loop_exit
      _
    %1099 = vsyncpa [#allocation8], 1
    %s1100 = scalar_lea.sflag [#allocation8], 1
    %1101 = vsyncpa %s1100, 1
    %1102 = vsyncpa [#allocation11], 1
    %1103 = vsyncpa [#allocation14], 1
    %1104 = vsyncpa [#allocation9], 1
    %s1105 = scalar_lea.sflag [#allocation9], 1
    %1106 = vsyncpa %s1105, 1

</llo_original>
